<compile_context>
chip_gen: v7x
topology: tpu7x:2x2x1
jax: 0.10.0
libtpu: 0.0.40
codegen_flags: <defaults>
</compile_context>

<pallas_src>
import functools

import jax
import jax.numpy as jnp
from jax.experimental import pallas as pl
from jax.experimental.pallas import tpu as pltpu

LANES = 128
SUBLANES = 8
NUM_SPLITS = 2          # leading "parallel" grid axis (v7x has 2 TensorCores)


def _round_up(x, m):
    return ((x + m - 1) // m) * m


def _pick_block_rows(rows, bytes_per_row_pair):
    """Rows per tile: as big as the scoped-VMEM envelope comfortably allows."""
    try:
        kind = jax.devices()[0].device_kind.lower()
    except Exception:  # defensive: never let detection break the kernel
        kind = ""
    newer = ("v6" in kind) or ("v7" in kind)
    # Per-pipeline-buffer budget for BOTH inputs combined.
    #   v6e/v7x: 8 MiB  -> 16 MiB double-buffered, fits the 32 MiB limit we
    #                      request below; amortizes the ~0.35us/step overhead.
    #   older / unknown: 4 MiB -> v5e is HBM-bound anyway; stay conservative.
    budget = (8 if newer else 4) * 1024 * 1024
    target = max(SUBLANES,
                 (budget // bytes_per_row_pair) // SUBLANES * SUBLANES)
    # Cap so that mid-sized inputs still produce >= NUM_SPLITS blocks and both
    # core-splits get work.
    return max(SUBLANES,
               min(target, _round_up(pl.cdiv(rows, NUM_SPLITS), SUBLANES)))


def _sigloss_reduce_kernel(pred_ref, gt_ref, out_ref, *,
                           eps, max_depth, use_valid_mask, total,
                           block_rows, inner, exact_cover):
    """Accumulates per-split [valid_count, sum(g), sum(g*g)] into out_ref."""
    c = pl.program_id(0)            # core-split axis ("parallel")
    i = pl.program_id(1)            # streaming axis ("arbitrary")

    @pl.when(i == 0)
    def _init():
        out_ref[...] = jnp.zeros_like(out_ref)

    pred = pred_ref[...].astype(jnp.float32)
    gt = gt_ref[...].astype(jnp.float32)

    # PyTorch-exact: g = log(pred + eps) - log(gt + eps).  Two EUP logs (EUP
    # has slack in this kernel) and no f32 divide (VALU Newton steps avoided).
    log_ratio = jnp.log(pred + eps) - jnp.log(gt + eps)

    def fold(x):
        # (block_rows, 128) -> (8, 128) per-lane partial sums: pure VALU adds;
        # the expensive cross-lane reduction happens once, in the wrapper.
        return jnp.sum(x.reshape(block_rows // SUBLANES, SUBLANES, LANES),
                       axis=0)

    def depth_valid(gt_f32):
        v = gt_f32 > 0.001
        if max_depth is not None:
            v = jnp.logical_and(v, gt_f32 <= max_depth)
        return v

    def accumulate(g, cnt_update):
        out_ref[0, 0, :, :] += cnt_update
        out_ref[0, 1, :, :] += fold(g)
        out_ref[0, 2, :, :] += fold(g * g)

    def hot_path():
        # Block provably inside [0, total): no positional mask at all.
        if use_valid_mask:
            valid = depth_valid(gt)
            accumulate(jnp.where(valid, log_ratio, 0.0),
                       fold(valid.astype(jnp.float32)))
        else:
            # Every element counts: add the count as a constant splat instead
            # of folding an all-ones mask.
            accumulate(log_ratio,
                       jnp.full((SUBLANES, LANES),
                                float(block_rows // SUBLANES), jnp.float32))

    def cold_path(block_global):
        # Last / partial / phantom block: mask every flat index >= total.
        # Covers OOB DMA garbage and any wrapper padding.
        # NOTE: int32 flat indices limit inputs to < 2**31 elements.
        row = jax.lax.broadcasted_iota(jnp.int32, (block_rows, LANES), 0)
        col = jax.lax.broadcasted_iota(jnp.int32, (block_rows, LANES), 1)
        flat = (block_global * block_rows + row) * LANES + col
        valid = flat < total
        if use_valid_mask:
            valid = jnp.logical_and(valid, depth_valid(gt))
        accumulate(jnp.where(valid, log_ratio, 0.0),
                   fold(valid.astype(jnp.float32)))

    if exact_cover:
        hot_path()
    else:
        block_global = c * inner + i
        is_full = (block_global + 1) * (block_rows * LANES) <= total

        @pl.when(is_full)
        def _():
            hot_path()

        @pl.when(jnp.logical_not(is_full))
        def _():
            cold_path(block_global)


def _masked_moments(depth_pred, depth_gt, *, eps, max_depth, valid_mask):
    """(count, sum g, sum g^2) over valid pixels, via one Pallas reduction."""
    assert depth_pred.shape == depth_gt.shape
    total = int(depth_pred.size)

    pred = depth_pred.reshape(-1)   # keep input dtype; cast after the DMA
    gt = depth_gt.reshape(-1)

    # Depth maps are essentially always a multiple of 128 elements, so this
    # reshape is a free re-layout with no pad copy.  The rare remainder case
    # pays one small pad; padded elements are masked in-kernel via `total`.
    if total % LANES != 0:
        pad = LANES - total % LANES
        pred = jnp.pad(pred, (0, pad))
        gt = jnp.pad(gt, (0, pad))
    rows = pred.shape[0] // LANES
    pred2d = pred.reshape(rows, LANES)
    gt2d = gt.reshape(rows, LANES)

    bytes_per_row_pair = LANES * (pred2d.dtype.itemsize + gt2d.dtype.itemsize)
    block_rows = _pick_block_rows(rows, bytes_per_row_pair)

    blocks_total = pl.cdiv(rows, block_rows)
    num_splits = min(NUM_SPLITS, blocks_total)
    inner = pl.cdiv(blocks_total, num_splits)
    last_block = blocks_total - 1
    exact_cover = (num_splits * inner * block_rows * LANES == total)

    if num_splits * inner != blocks_total:
        # Phantom trailing blocks (odd block count): clamp them onto the last
        # real block; their contribution is masked away in the cold path.
        def in_index(c, i):
            return (jnp.minimum(c * inner + i, last_block), 0)
    else:
        def in_index(c, i):
            return (c * inner + i, 0)

    kernel = functools.partial(
        _sigloss_reduce_kernel,
        eps=eps, max_depth=max_depth, use_valid_mask=valid_mask, total=total,
        block_rows=block_rows, inner=inner, exact_cover=exact_cover)

    tile_bytes = block_rows * bytes_per_row_pair          # both inputs, 1 buf
    vmem_limit = int(min(max(2 * tile_bytes + (8 << 20), 32 << 20), 48 << 20))
    cost = pl.CostEstimate(
        flops=10 * total,
        transcendentals=2 * total,
        bytes_accessed=rows * bytes_per_row_pair
        + num_splits * 3 * SUBLANES * LANES * 4)

    out = pl.pallas_call(
        kernel,
        out_shape=jax.ShapeDtypeStruct((num_splits, 3, SUBLANES, LANES),
                                       jnp.float32),
        grid_spec=pltpu.PrefetchScalarGridSpec(
            num_scalar_prefetch=0,
            grid=(num_splits, inner),
            in_specs=[
                pl.BlockSpec((block_rows, LANES), in_index),
                pl.BlockSpec((block_rows, LANES), in_index),
            ],
            out_specs=pl.BlockSpec((1, 3, SUBLANES, LANES),
                                   lambda c, i: (c, 0, 0, 0)),
        ),
        compiler_params=pltpu.CompilerParams(
            dimension_semantics=("parallel", "arbitrary"),
            vmem_limit_bytes=vmem_limit),
        cost_estimate=cost,
    )(pred2d, gt2d)

    # Tiny (num_splits*3*1024-element) cross-core + cross-lane reduction.
    moments = jnp.sum(out, axis=(0, 2, 3))
    return moments[0], moments[1], moments[2]


class SigLoss:
    """JAX/Pallas port of the PyTorch SigLoss module (forward pass)."""

    def __init__(self, valid_mask=True, loss_weight=1.0, max_depth=None,
                 warm_up=False, warm_iter=100):
        self.valid_mask = valid_mask
        self.loss_weight = loss_weight
        self.max_depth = max_depth
        self.eps = 0.001
        self.warm_up = warm_up
        self.warm_iter = warm_iter
        # TODO(synk): host-side Python counter (same as the PyTorch module);
        # under jit the warm-up branch choice is frozen at trace time.
        self.warm_up_counter = 0

    def sigloss(self, depth_pred, depth_gt):
        cnt, s, s2 = _masked_moments(
            depth_pred, depth_gt,
            eps=self.eps, max_depth=self.max_depth,
            valid_mask=self.valid_mask)

        mean_g = s / cnt
        if self.warm_up and self.warm_up_counter < self.warm_iter:
            self.warm_up_counter += 1
            g = 0.15 * mean_g * mean_g
            return jnp.sqrt(g)

        # torch.var default: unbiased (ddof=1).  Same cnt<=1 hazard as PyTorch.
        var_g = (s2 - cnt * mean_g * mean_g) / (cnt - 1.0)
        dg = var_g + 0.15 * mean_g * mean_g
        return jnp.sqrt(dg)

    def __call__(self, depth_pred, depth_gt):
        return self.loss_weight * self.sigloss(depth_pred, depth_gt)


def _reference_sigloss(depth_pred, depth_gt, eps=0.001, max_depth=None,
                       valid_mask=True, loss_weight=1.0):
    """Pure-JAX reference mirroring the PyTorch code."""
    pred = depth_pred.reshape(-1).astype(jnp.float32)
    gt = depth_gt.reshape(-1).astype(jnp.float32)
    if valid_mask:
        mask = gt > 0.001
        if max_depth is not None:
            mask = jnp.logical_and(mask, gt <= max_depth)
    else:
        mask = jnp.ones_like(gt, dtype=bool)
    g = jnp.log(pred + eps) - jnp.log(gt + eps)
    g = jnp.where(mask, g, 0.0)
    n = jnp.sum(mask.astype(jnp.float32))
    mean = jnp.sum(g) / n
    var = jnp.sum(jnp.where(mask, (g - mean) ** 2, 0.0)) / (n - 1.0)
    dg = var + 0.15 * mean * mean
    return loss_weight * jnp.sqrt(dg)


if __name__ == "__main__":
    key = jax.random.PRNGKey(0)
    k1, k2, k3 = jax.random.split(key, 3)

    # 2*1*32*36 = 2304 px = 18 lane-rows: exercises the 2-way core split, a
    # full (hot) block and a partial (cold, masked) block without any padding.
    N, C, H, W = 2, 1, 32, 36
    depth_pred = jax.random.uniform(k1, (N, C, H, W), jnp.float32,
                                    minval=0.1, maxval=10.0)
    depth_gt = jax.random.uniform(k2, (N, C, H, W), jnp.float32,
                                  minval=0.1, maxval=10.0)
    # Knock out ~30% of gt pixels (invalid depth -> masked out).
    drop = jax.random.uniform(k3, (N, C, H, W)) < 0.3
    depth_gt = jnp.where(drop, 0.0, depth_gt)

    # valid_mask=True with a max-depth threshold (default configuration).
    loss_mod = SigLoss(valid_mask=True, loss_weight=1.0, max_depth=10.0)
    loss = jax.block_until_ready(loss_mod(depth_pred, depth_gt))
    ref = _reference_sigloss(depth_pred, depth_gt, max_depth=10.0,
                             valid_mask=True)
    assert jnp.isfinite(loss), "loss is not finite"
    assert abs(float(loss) - float(ref)) < 1e-4 * max(1.0, abs(float(ref))), (
        float(loss), float(ref))

    # valid_mask=False path (every pixel counts) with a loss weight.
    loss_mod2 = SigLoss(valid_mask=False, loss_weight=2.0)
    loss2 = jax.block_until_ready(loss_mod2(depth_pred, depth_gt))
    ref2 = _reference_sigloss(depth_pred, depth_gt, valid_mask=False,
                              loss_weight=2.0)
    assert jnp.isfinite(loss2), "loss2 is not finite"
    assert abs(float(loss2) - float(ref2)) < 1e-4 * max(1.0, abs(float(ref2))), (
        float(loss2), float(ref2))

    print("KERNEL_OK")
</pallas_src>

<mosaic_0001>
module attributes {stable_mosaic.version = 11 : i64} {
  func.func @_sigloss_reduce_kernel(%arg0: i32, %arg1: i32, %arg2: memref<16x128xf32, #tpu.memory_space<vmem>>, %arg3: memref<16x128xf32, #tpu.memory_space<vmem>>, %arg4: memref<1x3x8x128xf32, #tpu.memory_space<vmem>>) attributes {dimension_semantics = [#tpu.dimension_semantics<parallel>, #tpu.dimension_semantics<arbitrary>], iteration_bounds = array<i64: 2, 1>, scalar_prefetch = 0 : i64, scratch_operands = 0 : i64, tpu.core_type = #tpu.core_type<tc>, window_params = [{transform_indices = @transform_0, window_bounds = array<i64: 16, 128>}, {transform_indices = @transform_1, window_bounds = array<i64: 16, 128>}, {transform_indices = @transform_2, window_bounds = array<i64: 1, 3, 8, 128>}]} {
    %c0_i32 = arith.constant 0 : i32
    %0 = arith.cmpi eq, %arg1, %c0_i32 : i32
    %1 = arith.extui %0 : i1 to i32
    %c0_i32_0 = arith.constant 0 : i32
    %2 = arith.cmpi ne, %1, %c0_i32_0 : i32
    scf.if %2 {
      %cst_8 = arith.constant 0.000000e+00 : f32
      %22 = vector.broadcast %cst_8 : f32 to vector<1x3x8x128xf32>
      %c0_9 = arith.constant 0 : index
      %c0_10 = arith.constant 0 : index
      %c0_11 = arith.constant 0 : index
      %c0_12 = arith.constant 0 : index
      %23 = vector.load %arg4[%c0_9, %c0_10, %c0_11, %c0_12] : memref<1x3x8x128xf32, #tpu.memory_space<vmem>>, vector<1x3x8x128xf32>
      tpu.vector_store %arg4[%c0_9, %c0_10, %c0_11, %c0_12], %22 {strides = array<i32>} : memref<1x3x8x128xf32, #tpu.memory_space<vmem>>, vector<1x3x8x128xf32>,
    } else {
    }
    %c0 = arith.constant 0 : index
    %c0_1 = arith.constant 0 : index
    %3 = vector.load %arg2[%c0, %c0_1] : memref<16x128xf32, #tpu.memory_space<vmem>>, vector<16x128xf32>
    %c0_2 = arith.constant 0 : index
    %c0_3 = arith.constant 0 : index
    %4 = vector.load %arg3[%c0_2, %c0_3] : memref<16x128xf32, #tpu.memory_space<vmem>>, vector<16x128xf32>
    %cst = arith.constant 1.000000e-03 : f32
    %5 = vector.broadcast %cst : f32 to vector<16x128xf32>
    %6 = arith.addf %3, %5 : vector<16x128xf32>
    %7 = math.log %6 : vector<16x128xf32>
    %cst_4 = arith.constant 1.000000e-03 : f32
    %8 = vector.broadcast %cst_4 : f32 to vector<16x128xf32>
    %9 = arith.addf %4, %8 : vector<16x128xf32>
    %10 = math.log %9 : vector<16x128xf32>
    %11 = arith.subf %7, %10 : vector<16x128xf32>
    %c1_i32 = arith.constant 1 : i32
    %12 = arith.muli %arg0, %c1_i32 : i32
    %13 = arith.addi %12, %arg1 : i32
    %c1_i32_5 = arith.constant 1 : i32
    %14 = arith.addi %13, %c1_i32_5 : i32
    %c2048_i32 = arith.constant 2048 : i32
    %15 = arith.muli %14, %c2048_i32 : i32
    %c2304_i32 = arith.constant 2304 : i32
    %16 = arith.cmpi sle, %15, %c2304_i32 : i32
    %17 = arith.extui %16 : i1 to i32
    %c0_i32_6 = arith.constant 0 : i32
    %18 = arith.cmpi ne, %17, %c0_i32_6 : i32
    scf.if %18 {
      %cst_8 = arith.constant 1.000000e-03 : f32
      %22 = vector.broadcast %cst_8 : f32 to vector<16x128xf32>
      %23 = arith.cmpf ogt, %4, %22 : vector<16x128xf32>
      %cst_9 = arith.constant 1.000000e+01 : f32
      %24 = vector.broadcast %cst_9 : f32 to vector<16x128xf32>
      %25 = arith.cmpf ole, %4, %24 : vector<16x128xf32>
      %26 = arith.andi %23, %25 : vector<16x128xi1>
      %cst_10 = arith.constant 0.000000e+00 : f32
      %27 = vector.broadcast %cst_10 : f32 to vector<16x128xf32>
      %28 = arith.select %26, %11, %27 : vector<16x128xi1>, vector<16x128xf32>
      %29 = arith.extui %26 : vector<16x128xi1> to vector<16x128xi32>
      %30 = arith.sitofp %29 : vector<16x128xi32> to vector<16x128xf32>
      %31 = vector.shape_cast %30 : vector<16x128xf32> to vector<2x8x128xf32>
      %cst_11 = arith.constant dense<0.000000e+00> : vector<8x128xf32>
      %32 = vector.multi_reduction <add>, %31, %cst_11 [0] : vector<2x8x128xf32> to vector<8x128xf32>
      %c0_12 = arith.constant 0 : index
      %c0_13 = arith.constant 0 : index
      %c0_14 = arith.constant 0 : index
      %c0_15 = arith.constant 0 : index
      %33 = vector.load %arg4[%c0_12, %c0_13, %c0_14, %c0_15] : memref<1x3x8x128xf32, #tpu.memory_space<vmem>>, vector<1x1x8x128xf32>
      %34 = vector.shape_cast %33 : vector<1x1x8x128xf32> to vector<8x128xf32>
      %35 = arith.addf %34, %32 : vector<8x128xf32>
      %c0_16 = arith.constant 0 : index
      %c0_17 = arith.constant 0 : index
      %c0_18 = arith.constant 0 : index
      %c0_19 = arith.constant 0 : index
      %36 = vector.load %arg4[%c0_16, %c0_17, %c0_18, %c0_19] : memref<1x3x8x128xf32, #tpu.memory_space<vmem>>, vector<1x1x8x128xf32>
      %37 = vector.shape_cast %36 : vector<1x1x8x128xf32> to vector<8x128xf32>
      %38 = vector.shape_cast %35 : vector<8x128xf32> to vector<1x1x8x128xf32>
      tpu.vector_store %arg4[%c0_16, %c0_17, %c0_18, %c0_19], %38 {strides = array<i32>} : memref<1x3x8x128xf32, #tpu.memory_space<vmem>>, vector<1x1x8x128xf32>,
      %c0_20 = arith.constant 0 : index
      %c1 = arith.constant 1 : index
      %c0_21 = arith.constant 0 : index
      %c0_22 = arith.constant 0 : index
      %39 = vector.load %arg4[%c0_20, %c1, %c0_21, %c0_22] : memref<1x3x8x128xf32, #tpu.memory_space<vmem>>, vector<1x1x8x128xf32>
      %40 = vector.shape_cast %39 : vector<1x1x8x128xf32> to vector<8x128xf32>
      %41 = vector.shape_cast %28 : vector<16x128xf32> to vector<2x8x128xf32>
      %cst_23 = arith.constant dense<0.000000e+00> : vector<8x128xf32>
      %42 = vector.multi_reduction <add>, %41, %cst_23 [0] : vector<2x8x128xf32> to vector<8x128xf32>
      %43 = arith.addf %40, %42 : vector<8x128xf32>
      %c0_24 = arith.constant 0 : index
      %c1_25 = arith.constant 1 : index
      %c0_26 = arith.constant 0 : index
      %c0_27 = arith.constant 0 : index
      %44 = vector.load %arg4[%c0_24, %c1_25, %c0_26, %c0_27] : memref<1x3x8x128xf32, #tpu.memory_space<vmem>>, vector<1x1x8x128xf32>
      %45 = vector.shape_cast %44 : vector<1x1x8x128xf32> to vector<8x128xf32>
      %46 = vector.shape_cast %43 : vector<8x128xf32> to vector<1x1x8x128xf32>
      tpu.vector_store %arg4[%c0_24, %c1_25, %c0_26, %c0_27], %46 {strides = array<i32>} : memref<1x3x8x128xf32, #tpu.memory_space<vmem>>, vector<1x1x8x128xf32>,
      %c0_28 = arith.constant 0 : index
      %c2 = arith.constant 2 : index
      %c0_29 = arith.constant 0 : index
      %c0_30 = arith.constant 0 : index
      %47 = vector.load %arg4[%c0_28, %c2, %c0_29, %c0_30] : memref<1x3x8x128xf32, #tpu.memory_space<vmem>>, vector<1x1x8x128xf32>
      %48 = vector.shape_cast %47 : vector<1x1x8x128xf32> to vector<8x128xf32>
      %49 = arith.mulf %28, %28 : vector<16x128xf32>
      %50 = vector.shape_cast %49 : vector<16x128xf32> to vector<2x8x128xf32>
      %cst_31 = arith.constant dense<0.000000e+00> : vector<8x128xf32>
      %51 = vector.multi_reduction <add>, %50, %cst_31 [0] : vector<2x8x128xf32> to vector<8x128xf32>
      %52 = arith.addf %48, %51 : vector<8x128xf32>
      %c0_32 = arith.constant 0 : index
      %c2_33 = arith.constant 2 : index
      %c0_34 = arith.constant 0 : index
      %c0_35 = arith.constant 0 : index
      %53 = vector.load %arg4[%c0_32, %c2_33, %c0_34, %c0_35] : memref<1x3x8x128xf32, #tpu.memory_space<vmem>>, vector<1x1x8x128xf32>
      %54 = vector.shape_cast %53 : vector<1x1x8x128xf32> to vector<8x128xf32>
      %55 = vector.shape_cast %52 : vector<8x128xf32> to vector<1x1x8x128xf32>
      tpu.vector_store %arg4[%c0_32, %c2_33, %c0_34, %c0_35], %55 {strides = array<i32>} : memref<1x3x8x128xf32, #tpu.memory_space<vmem>>, vector<1x1x8x128xf32>,
    } else {
    }
    %true = arith.constant true
    %19 = arith.xori %16, %true : i1
    %20 = arith.extui %19 : i1 to i32
    %c0_i32_7 = arith.constant 0 : i32
    %21 = arith.cmpi ne, %20, %c0_i32_7 : i32
    scf.if %21 {
      %22 = tpu.iota {dimensions = array<i32: 0>} : vector<16x128xi32>
      %23 = tpu.iota {dimensions = array<i32: 1>} : vector<16x128xi32>
      %c16_i32 = arith.constant 16 : i32
      %24 = arith.muli %13, %c16_i32 : i32
      %25 = vector.broadcast %24 : i32 to vector<16x128xi32>
      %26 = arith.addi %25, %22 : vector<16x128xi32>
      %c128_i32 = arith.constant 128 : i32
      %27 = vector.broadcast %c128_i32 : i32 to vector<16x128xi32>
      %28 = arith.muli %26, %27 : vector<16x128xi32>
      %29 = arith.addi %28, %23 : vector<16x128xi32>
      %c2304_i32_8 = arith.constant 2304 : i32
      %30 = vector.broadcast %c2304_i32_8 : i32 to vector<16x128xi32>
      %31 = arith.cmpi slt, %29, %30 : vector<16x128xi32>
      %cst_9 = arith.constant 1.000000e-03 : f32
      %32 = vector.broadcast %cst_9 : f32 to vector<16x128xf32>
      %33 = arith.cmpf ogt, %4, %32 : vector<16x128xf32>
      %cst_10 = arith.constant 1.000000e+01 : f32
      %34 = vector.broadcast %cst_10 : f32 to vector<16x128xf32>
      %35 = arith.cmpf ole, %4, %34 : vector<16x128xf32>
      %36 = arith.andi %33, %35 : vector<16x128xi1>
      %37 = arith.andi %31, %36 : vector<16x128xi1>
      %cst_11 = arith.constant 0.000000e+00 : f32
      %38 = vector.broadcast %cst_11 : f32 to vector<16x128xf32>
      %39 = arith.select %37, %11, %38 : vector<16x128xi1>, vector<16x128xf32>
      %40 = arith.extui %37 : vector<16x128xi1> to vector<16x128xi32>
      %41 = arith.sitofp %40 : vector<16x128xi32> to vector<16x128xf32>
      %42 = vector.shape_cast %41 : vector<16x128xf32> to vector<2x8x128xf32>
      %cst_12 = arith.constant dense<0.000000e+00> : vector<8x128xf32>
      %43 = vector.multi_reduction <add>, %42, %cst_12 [0] : vector<2x8x128xf32> to vector<8x128xf32>
      %c0_13 = arith.constant 0 : index
      %c0_14 = arith.constant 0 : index
      %c0_15 = arith.constant 0 : index
      %c0_16 = arith.constant 0 : index
      %44 = vector.load %arg4[%c0_13, %c0_14, %c0_15, %c0_16] : memref<1x3x8x128xf32, #tpu.memory_space<vmem>>, vector<1x1x8x128xf32>
      %45 = vector.shape_cast %44 : vector<1x1x8x128xf32> to vector<8x128xf32>
      %46 = arith.addf %45, %43 : vector<8x128xf32>
      %c0_17 = arith.constant 0 : index
      %c0_18 = arith.constant 0 : index
      %c0_19 = arith.constant 0 : index
      %c0_20 = arith.constant 0 : index
      %47 = vector.load %arg4[%c0_17, %c0_18, %c0_19, %c0_20] : memref<1x3x8x128xf32, #tpu.memory_space<vmem>>, vector<1x1x8x128xf32>
      %48 = vector.shape_cast %47 : vector<1x1x8x128xf32> to vector<8x128xf32>
      %49 = vector.shape_cast %46 : vector<8x128xf32> to vector<1x1x8x128xf32>
      tpu.vector_store %arg4[%c0_17, %c0_18, %c0_19, %c0_20], %49 {strides = array<i32>} : memref<1x3x8x128xf32, #tpu.memory_space<vmem>>, vector<1x1x8x128xf32>,
      %c0_21 = arith.constant 0 : index
      %c1 = arith.constant 1 : index
      %c0_22 = arith.constant 0 : index
      %c0_23 = arith.constant 0 : index
      %50 = vector.load %arg4[%c0_21, %c1, %c0_22, %c0_23] : memref<1x3x8x128xf32, #tpu.memory_space<vmem>>, vector<1x1x8x128xf32>
      %51 = vector.shape_cast %50 : vector<1x1x8x128xf32> to vector<8x128xf32>
      %52 = vector.shape_cast %39 : vector<16x128xf32> to vector<2x8x128xf32>
      %cst_24 = arith.constant dense<0.000000e+00> : vector<8x128xf32>
      %53 = vector.multi_reduction <add>, %52, %cst_24 [0] : vector<2x8x128xf32> to vector<8x128xf32>
      %54 = arith.addf %51, %53 : vector<8x128xf32>
      %c0_25 = arith.constant 0 : index
      %c1_26 = arith.constant 1 : index
      %c0_27 = arith.constant 0 : index
      %c0_28 = arith.constant 0 : index
      %55 = vector.load %arg4[%c0_25, %c1_26, %c0_27, %c0_28] : memref<1x3x8x128xf32, #tpu.memory_space<vmem>>, vector<1x1x8x128xf32>
      %56 = vector.shape_cast %55 : vector<1x1x8x128xf32> to vector<8x128xf32>
      %57 = vector.shape_cast %54 : vector<8x128xf32> to vector<1x1x8x128xf32>
      tpu.vector_store %arg4[%c0_25, %c1_26, %c0_27, %c0_28], %57 {strides = array<i32>} : memref<1x3x8x128xf32, #tpu.memory_space<vmem>>, vector<1x1x8x128xf32>,
      %c0_29 = arith.constant 0 : index
      %c2 = arith.constant 2 : index
      %c0_30 = arith.constant 0 : index
      %c0_31 = arith.constant 0 : index
      %58 = vector.load %arg4[%c0_29, %c2, %c0_30, %c0_31] : memref<1x3x8x128xf32, #tpu.memory_space<vmem>>, vector<1x1x8x128xf32>
      %59 = vector.shape_cast %58 : vector<1x1x8x128xf32> to vector<8x128xf32>
      %60 = arith.mulf %39, %39 : vector<16x128xf32>
      %61 = vector.shape_cast %60 : vector<16x128xf32> to vector<2x8x128xf32>
      %cst_32 = arith.constant dense<0.000000e+00> : vector<8x128xf32>
      %62 = vector.multi_reduction <add>, %61, %cst_32 [0] : vector<2x8x128xf32> to vector<8x128xf32>
      %63 = arith.addf %59, %62 : vector<8x128xf32>
      %c0_33 = arith.constant 0 : index
      %c2_34 = arith.constant 2 : index
      %c0_35 = arith.constant 0 : index
      %c0_36 = arith.constant 0 : index
      %64 = vector.load %arg4[%c0_33, %c2_34, %c0_35, %c0_36] : memref<1x3x8x128xf32, #tpu.memory_space<vmem>>, vector<1x1x8x128xf32>
      %65 = vector.shape_cast %64 : vector<1x1x8x128xf32> to vector<8x128xf32>
      %66 = vector.shape_cast %63 : vector<8x128xf32> to vector<1x1x8x128xf32>
      tpu.vector_store %arg4[%c0_33, %c2_34, %c0_35, %c0_36], %66 {strides = array<i32>} : memref<1x3x8x128xf32, #tpu.memory_space<vmem>>, vector<1x1x8x128xf32>,
    } else {
    }
    return
  }
  func.func @transform_0(%arg0: i32, %arg1: i32) -> (i32, i32) {
    %c1_i32 = arith.constant 1 : i32
    %0 = arith.muli %arg0, %c1_i32 : i32
    %1 = arith.addi %0, %arg1 : i32
    %c0_i32 = arith.constant 0 : i32
    %c0_i32_0 = arith.constant 0 : i32
    return %1, %c0_i32 : i32, i32
  }
  func.func @transform_1(%arg0: i32, %arg1: i32) -> (i32, i32) {
    %c1_i32 = arith.constant 1 : i32
    %0 = arith.muli %arg0, %c1_i32 : i32
    %1 = arith.addi %0, %arg1 : i32
    %c0_i32 = arith.constant 0 : i32
    %c0_i32_0 = arith.constant 0 : i32
    return %1, %c0_i32 : i32, i32
  }
  func.func @transform_2(%arg0: i32, %arg1: i32) -> (i32, i32, i32, i32) {
    %c0_i32 = arith.constant 0 : i32
    %c0_i32_0 = arith.constant 0 : i32
    %c0_i32_1 = arith.constant 0 : i32
    %c0_i32_2 = arith.constant 0 : i32
    return %arg0, %c0_i32, %c0_i32_0, %c0_i32_1 : i32, i32, i32, i32
  }
}

</mosaic_0001>

<llo_original>
// kernel: tpu_custom_call.1
$region0: #{tpu_custom_call.1}
  #allocation0 [shape = 'u32[]', space=smem, size = 0x4, offset = 0x4, fixed_abs, tag = 'smem constant byte address 0x4 - core index']
  #allocation1 [shape = 'u32[144,128]{1,0:T(1,128)}', space=vmem, size = 0x12000, scoped, tag = 'internal scratch']
  %s0 = inlined_call_operand.hbm [shape: f32[18,128], index: 0, kind: input, shape index: {}]
  %s1 = inlined_call_operand.hbm [shape: f32[18,128], index: 1, kind: input, shape index: {}]
  %s2 = inlined_call_operand.hbm [shape: f32[2,3,8,128], index: 2, kind: output, shape index: {}]
  %s3 = sld [smem:[#allocation0]]
  $region61: #{tpu_custom_call.1} parent=0
    _
  %s5 = ssub.s32 1, %s3
  %s6 = scalar_select 0, %s5, %s3
  $region1: #{tpu_custom_call.1} parent=0
    #allocation2 [shape = 'u8[16384]{0}', space=vmem, size = 0x4000, scoped, tag = 'input window, operand 0']
    #allocation3 [shape = 's32[2]{0}', space=sflag, size = 0x8, scoped, tag = 'scoped memory for tpu_custom_call.1']
    #allocation4 [shape = 's32[2]{0}', space=sflag, size = 0x8, scoped, tag = 'scoped memory for tpu_custom_call.1']
    #allocation5 [shape = 'u8[16384]{0}', space=vmem, size = 0x4000, scoped, tag = 'input window, operand 1']
    #allocation6 [shape = 's32[2]{0}', space=sflag, size = 0x8, scoped, tag = 'scoped memory for tpu_custom_call.1']
    #allocation7 [shape = 'u8[24576]{0}', space=vmem, size = 0x6000, scoped, tag = 'output window, operand 0']
    %7 = vsyncpa [#allocation3], 0
    %s8 = scalar_lea.sflag [#allocation3], 1
    %9 = vsyncpa %s8, 0
    %10 = vsyncpa [#allocation6], 0
    %s11 = scalar_lea.sflag [#allocation6], 1
    %12 = vsyncpa %s11, 0
    %13 = vsyncpa [#allocation4], 0
    %s14 = scalar_lea.sflag [#allocation4], 1
    %15 = vsyncpa %s14, 0
    loop: start=0, step=1, limit=4
    $region2: #{tpu_custom_call.1} parent=1 // loop_pre_header
      _
    $region3: #{tpu_custom_call.1} parent=1 // loop_header
      %s17 = sphi 0, %s21
      %p18 = scmp.ge.s32.totalorder %s17, 4
      %s24 = sphi 0, %s36
      %s25 = sphi 0, %s32
      %s26 = sphi 0, %s24
      %s27 = sphi 0, %s25
      %s28 = sphi 0, %s26
      %s29 = sphi 0, %s27
      %s41 = sphi 0, %s43
      %s44 = sphi 0, %s41
      %s45 = sphi 0, %s44
      %s61 = sphi 0, %s45
      %s69 = sphi 0, %s71
      %s72 = sphi 0, %s69
      %s73 = sphi 0, %s72
      %s89 = sphi 0, %s73
      %s95 = sphi 0, %s97
      %s98 = sphi 0, %s95
      %s99 = sphi 0, %s98
      %s115 = sphi 0, %s99
    $region4: #{tpu_custom_call.1} parent=1 // loop_header_branch
      %20 = sbr.rel (%p18) target = $region8
    $region5: #{tpu_custom_call.1} parent=1 // loop_body
      %s22 = ssub.s32 %s17, 1
      %s23 = ssub.s32 %s17, 2
      %s30 = sadd.s32 1, %s25
      %p31 = scmp.ge.s32.totalorder %s30, 1
      %s32 = scalar_select %p31, 0, %s30
      %s33 = sadd.s32 1, %s24
      %s34 = scalar_select %p31, %s33, %s24
      %p35 = scmp.ge.s32.totalorder %s34, 2
      %s36 = scalar_select %p35, 0, %s34
      %s37 = sadd.s32 %s24, %s25
      %s38 = sadd.s32 %s36, %s32
      %s39 = ssub.s32 %s37, %s38
      %p40 = scmp.eq.s32.totalorder %s39, 0
      %s42 = sadd.s32 %s41, 1
      %s43 = scalar_select %p40, %s41, %s42
      %p46 = pneg %p40
      %p47 = scmp.eq.s32.totalorder %s17, 1
      %p48 = por %p46, %p47
      %p49 = scmp.ne.s32.totalorder %s41, %s44
      %p50 = scmp.eq.s32.totalorder %s17, 0
      %p51 = por %p49, %p50
      %p52 = scmp.ne.s32.totalorder %s41, %s44
      %p53 = scmp.eq.s32.totalorder %s22, 1
      %p54 = por %p52, %p53
      %p55 = scmp.ne.s32.totalorder %s44, %s45
      %p56 = scmp.eq.s32.totalorder %s22, 0
      %p57 = por %p55, %p56
      %p58 = scmp.ne.s32.totalorder %s44, %s45
      %p59 = scmp.eq.s32.totalorder %s23, 1
      %p60 = por %p58, %p59
      %p62 = scmp.ne.s32.totalorder %s45, %s61
      %p63 = scmp.eq.s32.totalorder %s23, 0
      %p64 = por %p62, %p63
      %s65 = sadd.s32 %s24, %s25
      %s66 = sadd.s32 %s36, %s32
      %s67 = ssub.s32 %s65, %s66
      %p68 = scmp.eq.s32.totalorder %s67, 0
      %s70 = sadd.s32 %s69, 1
      %s71 = scalar_select %p68, %s69, %s70
      %p74 = pneg %p68
      %p75 = scmp.eq.s32.totalorder %s17, 1
      %p76 = por %p74, %p75
      %p77 = scmp.ne.s32.totalorder %s69, %s72
      %p78 = scmp.eq.s32.totalorder %s17, 0
      %p79 = por %p77, %p78
      %p80 = scmp.ne.s32.totalorder %s69, %s72
      %p81 = scmp.eq.s32.totalorder %s22, 1
      %p82 = por %p80, %p81
      %p83 = scmp.ne.s32.totalorder %s72, %s73
      %p84 = scmp.eq.s32.totalorder %s22, 0
      %p85 = por %p83, %p84
      %p86 = scmp.ne.s32.totalorder %s72, %s73
      %p87 = scmp.eq.s32.totalorder %s23, 1
      %p88 = por %p86, %p87
      %p90 = scmp.ne.s32.totalorder %s73, %s89
      %p91 = scmp.eq.s32.totalorder %s23, 0
      %p92 = por %p90, %p91
      %s93 = ssub.s32 %s24, %s36
      %p94 = scmp.eq.s32.totalorder %s93, 0
      %s96 = sadd.s32 %s95, 1
      %s97 = scalar_select %p94, %s95, %s96
      %p100 = pneg %p94
      %p101 = scmp.eq.s32.totalorder %s17, 1
      %p102 = por %p100, %p101
      %p103 = scmp.ne.s32.totalorder %s95, %s98
      %p104 = scmp.eq.s32.totalorder %s17, 0
      %p105 = por %p103, %p104
      %p106 = scmp.ne.s32.totalorder %s95, %s98
      %p107 = scmp.eq.s32.totalorder %s22, 1
      %p108 = por %p106, %p107
      %p109 = scmp.ne.s32.totalorder %s98, %s99
      %p110 = scmp.eq.s32.totalorder %s22, 0
      %p111 = por %p109, %p110
      %p112 = scmp.ne.s32.totalorder %s98, %s99
      %p113 = scmp.eq.s32.totalorder %s23, 1
      %p114 = por %p112, %p113
      %p116 = scmp.ne.s32.totalorder %s99, %s115
      %p117 = scmp.eq.s32.totalorder %s23, 0
      %p118 = por %p116, %p117
      %p119 = scmp.le.s32.totalorder 1, %s17
      %p120 = scmp.lt.s32.totalorder %s17, 3
      %p121 = pnand %p119, %p120
      %p122 = pneg %p121
      // Predicated region
      $region9: #{tpu_custom_call.1} parent=5 // pred_check
        _
      $region10: #{tpu_custom_call.1} parent=5 // pred_check_branch
        %124 = sbr.rel (%p121) target = $region12
      $region11: #{tpu_custom_call.1} parent=5 // pred_region
        %s125 = ssub.s32 %s17, 1
      $region12: #{tpu_custom_call.1} parent=5 // pred_fallthru
        _
      %p126 = scmp.lt.s32.totalorder %s17, 2
      // Predicated region
      $region13: #{tpu_custom_call.1} parent=5 // pred_check
        %p127 = pneg %p126
      $region14: #{tpu_custom_call.1} parent=5 // pred_check_branch
        %129 = sbr.rel (%p127) target = $region16
      $region15: #{tpu_custom_call.1} parent=5 // pred_region
        // Predicated region
        $region17: #{tpu_custom_call.1} parent=15 // pred_check
          %p130 = pneg %p51
        $region18: #{tpu_custom_call.1} parent=15 // pred_check_branch
          %132 = sbr.rel (%p130) target = $region20
        $region19: #{tpu_custom_call.1} parent=15 // pred_region
          %s133 = sand.u32 %s41, 1
          %s134 = scalar_lea.sflag [#allocation3], %s133
          %s135 = sand.u32 %s41, 1
          %s136 = smul.addr %s135, 16
          %s137 = scalar_lea.vmem [#allocation2], %s136
          %s138 = sadd.s32 %s24, %s25
          %s139 = smul.u32 2, %s138
          %s140 = ssub.s32 3, %s139
          %p141 = scmp.lt.s32.totalorder %s140, 2
          %s142 = scalar_select %p141, %s140, 2
          %s143 = smul.u32 128, %s142
          %s145 = ssub.s32 256, %s143
          %146 = vsyncadd %s134, %s145
          %p147 = scmp.ne.s32.totalorder 0, %s143
          %s148 = smul.addr %s139, 128
          %s149 = scalar_lea.hbm %s0, %s148
          %s150 = smul.u32 8, %s142
          %s151 = sshll.u32 %s137, 4
          %s152 = int_to_ptr.vmem [resolvable:$true] %s151
          %s153 = sshll.u32 %s150, 4
          %157 = dma.hbm_to_vmem [thread:$0]  (%p147), %s149, %s153, %s152, %s134, 128, 128, 8
        $region20: #{tpu_custom_call.1} parent=15 // pred_fallthru
          _
        // Predicated region
        $region21: #{tpu_custom_call.1} parent=15 // pred_check
          %p158 = pneg %p79
        $region22: #{tpu_custom_call.1} parent=15 // pred_check_branch
          %160 = sbr.rel (%p158) target = $region24
        $region23: #{tpu_custom_call.1} parent=15 // pred_region
          %s161 = sand.u32 %s69, 1
          %s162 = scalar_lea.sflag [#allocation6], %s161
          %s163 = sand.u32 %s69, 1
          %s164 = smul.addr %s163, 16
          %s165 = scalar_lea.vmem [#allocation5], %s164
          %s166 = sadd.s32 %s24, %s25
          %s167 = smul.u32 2, %s166
          %s168 = ssub.s32 3, %s167
          %p169 = scmp.lt.s32.totalorder %s168, 2
          %s170 = scalar_select %p169, %s168, 2
          %s171 = smul.u32 128, %s170
          %s173 = ssub.s32 256, %s171
          %174 = vsyncadd %s162, %s173
          %p175 = scmp.ne.s32.totalorder 0, %s171
          %s176 = smul.addr %s167, 128
          %s177 = scalar_lea.hbm %s1, %s176
          %s178 = smul.u32 8, %s170
          %s179 = sshll.u32 %s165, 4
          %s180 = int_to_ptr.vmem [resolvable:$true] %s179
          %s181 = sshll.u32 %s178, 4
          %185 = dma.hbm_to_vmem [thread:$0]  (%p175), %s177, %s181, %s180, %s162, 128, 128, 8
        $region24: #{tpu_custom_call.1} parent=15 // pred_fallthru
          _
      $region16: #{tpu_custom_call.1} parent=5 // pred_fallthru
        _
      %p186 = scmp.le.s32.totalorder 1, %s17
      %p187 = scmp.lt.s32.totalorder %s17, 3
      %p188 = pnand %p186, %p187
      %p189 = pneg %p188
      // Predicated region
      $region25: #{tpu_custom_call.1} parent=5 // pred_check
        _
      $region26: #{tpu_custom_call.1} parent=5 // pred_check_branch
        %191 = sbr.rel (%p188) target = $region28
      $region27: #{tpu_custom_call.1} parent=5 // pred_region
        %s192 = ssub.s32 %s17, 1
        %s193 = sand.u32 %s44, 1
        %s194 = scalar_lea.sflag [#allocation3], %s193
        %s195 = sand.u32 %s44, 1
        %s196 = smul.addr %s195, 16
        %s197 = scalar_lea.vmem [#allocation2], %s196
        // Predicated region
        $region29: #{tpu_custom_call.1} parent=27 // pred_check
          %p198 = pneg %p57
        $region30: #{tpu_custom_call.1} parent=27 // pred_check_branch
          %200 = sbr.rel (%p198) target = $region32
        $region31: #{tpu_custom_call.1} parent=27 // pred_region
          %201 = dma.done %s194, 256
        $region32: #{tpu_custom_call.1} parent=27 // pred_fallthru
          _
        %s202 = sand.u32 %s72, 1
        %s203 = scalar_lea.sflag [#allocation6], %s202
        %s204 = sand.u32 %s72, 1
        %s205 = smul.addr %s204, 16
        %s206 = scalar_lea.vmem [#allocation5], %s205
        // Predicated region
        $region33: #{tpu_custom_call.1} parent=27 // pred_check
          %p207 = pneg %p85
        $region34: #{tpu_custom_call.1} parent=27 // pred_check_branch
          %209 = sbr.rel (%p207) target = $region36
        $region35: #{tpu_custom_call.1} parent=27 // pred_region
          %210 = dma.done %s203, 256
        $region36: #{tpu_custom_call.1} parent=27 // pred_fallthru
          _
        %s211 = sand.u32 %s44, 1
        %s212 = scalar_lea.sflag [#allocation3], %s211
        %s213 = sand.u32 %s44, 1
        %s214 = smul.addr %s213, 16
        %s215 = scalar_lea.vmem [#allocation2], %s214
        %p216 = pneg %p57
        %p217 = pneg %p54
        %s218 = sand.u32 %s72, 1
        %s219 = scalar_lea.sflag [#allocation6], %s218
        %s220 = sand.u32 %s72, 1
        %s221 = smul.addr %s220, 16
        %s222 = scalar_lea.vmem [#allocation5], %s221
        %p223 = pneg %p85
        %p224 = pneg %p82
        %p225 = pneg %p111
        %p226 = pneg %p108
        %s227 = sand.u32 %s98, 1
        %s228 = scalar_lea.sflag [#allocation4], %s227
        %s229 = sand.u32 %s98, 1
        %s230 = smul.addr %s229, 24
        %s231 = scalar_lea.vmem [#allocation7], %s230
        %s232 = sadd.s32 %s26, %s27
        %s233 = smul.u32 2, %s232
        %s234 = ssub.s32 3, %s233
        %p235 = scmp.lt.s32.totalorder %s234, 2
        %s236 = scalar_select %p235, %s234, 2
        %s237 = smul.u32 128, %s236
        %s238 = sadd.s32 %s26, %s27
        %s239 = smul.u32 2, %s238
        %s240 = ssub.s32 3, %s239
        %p241 = scmp.lt.s32.totalorder %s240, 2
        %s242 = scalar_select %p241, %s240, 2
        %s243 = smul.u32 128, %s242
        %p244 = scmp.eq.s32.totalorder %s27, 0
        // Predicated region
        $region37: #{tpu_custom_call.1} parent=27 // pred_check
          %p245 = pneg %p244
        $region38: #{tpu_custom_call.1} parent=27 // pred_check_branch
          %247 = sbr.rel (%p245) target = $region40
        $region39: #{tpu_custom_call.1} parent=27 // pred_region
          %248 = vst [vmem:[%s231] sm:$0xff] 0.0
          %249 = vst [vmem:[%s231 + $0x8] sm:$0xff] 0.0
          %250 = vst [vmem:[%s231 + $0x10] sm:$0xff] 0.0
        $region40: #{tpu_custom_call.1} parent=27 // pred_fallthru
          _
        %v251 = vld [vmem:[%s197] sm:$0xff]
        %v252 = vld [vmem:[%s197 + $0x8] sm:$0xff]
        %v253 = vld [vmem:[%s206] sm:$0xff]
        %v254 = vld [vmem:[%s206 + $0x8] sm:$0xff]
        %v255 = vadd.f32 %v251, 0.001
        %v256 = vadd.f32 %v252, 0.001
        %v257 = vlog2.pop %v255
        %v258 = vmul.f32 %v257, 0.6931472
        %v259 = vlog2.pop %v256
        %v260 = vmul.f32 %v259, 0.6931472
        %v261 = vadd.f32 %v253, 0.001
        %v262 = vadd.f32 %v254, 0.001
        %v263 = vlog2.pop %v261
        %v264 = vmul.f32 %v263, 0.6931472
        %v265 = vlog2.pop %v262
        %v266 = vmul.f32 %v265, 0.6931472
        %v267 = vsub.f32 %v258, %v264
        %v268 = vsub.f32 %v260, %v266
        %s269 = sadd.s32 %s26, %s27
        %s270 = sadd.s32 %s269, 1
        %s271 = smul.u32 %s270, 2048
        %p272 = scmp.le.s32.totalorder %s271, 2304
        // Predicated region
        $region41: #{tpu_custom_call.1} parent=27 // pred_check
          %p273 = pneg %p272
        $region42: #{tpu_custom_call.1} parent=27 // pred_check_branch
          %275 = sbr.rel (%p273) target = $region44
        $region43: #{tpu_custom_call.1} parent=27 // pred_region
          %vm276 = vcmp.gt.f32.partialorder %v253, 0.001
          %vm277 = vcmp.gt.f32.partialorder %v254, 0.001
          %vm278 = vcmp.le.f32.partialorder %v253, 10.0
          %vm279 = vcmp.le.f32.partialorder %v254, 10.0
          %vm280 = vmand %vm276, %vm278
          %vm281 = vmand %vm277, %vm279
          %v282 = vsel %vm280, %v267, 0.0
          %v283 = vsel %vm281, %v268, 0.0
          %v284 = vsel %vm280, 1, 0
          %v285 = vsel %vm281, 1, 0
          %v286 = vcvt.s32.f32 %v284
          %v287 = vcvt.s32.f32 %v285
          %v288 = vadd.f32 %v286, %v287
          %v289 = vld [vmem:[%s231] sm:$0xff]
          %v290 = vadd.f32 %v289, %v288
          %291 = vst [vmem:[%s231] sm:$0xff] %v290
          %s292 = scalar_lea.vmem %s231, 8 [#allocation7]
          %v293 = vld [vmem:[%s292] sm:$0xff]
          %v294 = vadd.f32 %v282, %v283
          %v295 = vadd.f32 %v293, %v294
          %296 = vst [vmem:[%s292] sm:$0xff] %v295
          %s297 = scalar_lea.vmem %s231, 16 [#allocation7]
          %v298 = vld [vmem:[%s297] sm:$0xff]
          %v299 = vmul.f32 %v282, %v282
          %v300 = vmul.f32 %v283, %v283
          %v301 = vadd.f32 %v299, %v300
          %v302 = vadd.f32 %v298, %v301
          %303 = vst [vmem:[%s297] sm:$0xff] %v302
        $region44: #{tpu_custom_call.1} parent=27 // pred_fallthru
          _
        %p304 = scmp.gt.s32.totalorder %s271, 2304
        // Predicated region
        $region45: #{tpu_custom_call.1} parent=27 // pred_check
          %p305 = pneg %p304
        $region46: #{tpu_custom_call.1} parent=27 // pred_check_branch
          %307 = sbr.rel (%p305) target = $region48
        $region47: #{tpu_custom_call.1} parent=27 // pred_region
          %v308 = vlaneseq
          %v309 = vshrl.u32 %v308, 7
          %v310 = vadd.s32 %v309, 8
          %v311 = vlaneseq
          %v312 = vand.u32 %v311, 127
          %s313 = smul.u32 %s269, 16
          %v314 = vstv %s313
          %v315 = vadd.s32 %v314, %v309
          %v316 = vadd.s32 %v314, %v310
          %v317 = vmul.u32 %v315, 128
          %v318 = vmul.u32 %v316, 128
          %v319 = vadd.s32 %v317, %v312
          %v320 = vadd.s32 %v318, %v312
          %vm321 = vcmp.lt.s32.totalorder %v319, 2304
          %vm322 = vcmp.lt.s32.totalorder %v320, 2304
          %vm323 = vcmp.gt.f32.partialorder %v253, 0.001
          %vm324 = vcmp.gt.f32.partialorder %v254, 0.001
          %vm325 = vcmp.le.f32.partialorder %v253, 10.0
          %vm326 = vcmp.le.f32.partialorder %v254, 10.0
          %vm327 = vmand %vm323, %vm325
          %vm328 = vmand %vm324, %vm326
          %vm329 = vmand %vm321, %vm327
          %vm330 = vmand %vm322, %vm328
          %v331 = vsel %vm329, %v267, 0.0
          %v332 = vsel %vm330, %v268, 0.0
          %v333 = vsel %vm329, 1, 0
          %v334 = vsel %vm330, 1, 0
          %v335 = vcvt.s32.f32 %v333
          %v336 = vcvt.s32.f32 %v334
          %v337 = vadd.f32 %v335, %v336
          %v338 = vld [vmem:[%s231] sm:$0xff]
          %v339 = vadd.f32 %v338, %v337
          %340 = vst [vmem:[%s231] sm:$0xff] %v339
          %s341 = scalar_lea.vmem %s231, 8 [#allocation7]
          %v342 = vld [vmem:[%s341] sm:$0xff]
          %v343 = vadd.f32 %v331, %v332
          %v344 = vadd.f32 %v342, %v343
          %345 = vst [vmem:[%s341] sm:$0xff] %v344
          %s346 = scalar_lea.vmem %s231, 16 [#allocation7]
          %v347 = vld [vmem:[%s346] sm:$0xff]
          %v348 = vmul.f32 %v331, %v331
          %v349 = vmul.f32 %v332, %v332
          %v350 = vadd.f32 %v348, %v349
          %v351 = vadd.f32 %v347, %v350
          %352 = vst [vmem:[%s346] sm:$0xff] %v351
        $region48: #{tpu_custom_call.1} parent=27 // pred_fallthru
          _
        %s353 = sand.u32 %s98, 1
        %s354 = scalar_lea.sflag [#allocation4], %s353
        %s355 = sand.u32 %s98, 1
        %s356 = smul.addr %s355, 24
        %s357 = scalar_lea.vmem [#allocation7], %s356
        // Predicated region
        $region49: #{tpu_custom_call.1} parent=27 // pred_check
          %p358 = pneg %p108
        $region50: #{tpu_custom_call.1} parent=27 // pred_check_branch
          %360 = sbr.rel (%p358) target = $region52
        $region51: #{tpu_custom_call.1} parent=27 // pred_region
          %s362 = ssub.s32 384, 384
          %363 = vsyncadd %s354, %s362
          %s364 = smul.addr %s26, 3
          %s365 = smul.addr %s364, 128
          %s366 = scalar_lea.hbm %s2, %s365
          %s367 = sshll.u32 %s357, 4
          %s368 = int_to_ptr.vmem [resolvable:$true] %s367
          %373 = dma.vmem_to_hbm [thread:$0]  %s368, 384, %s366, %s354, 128, 128, 8
        $region52: #{tpu_custom_call.1} parent=27 // pred_fallthru
          _
      $region28: #{tpu_custom_call.1} parent=5 // pred_fallthru
        _
      %p374 = scmp.le.s32.totalorder 2, %s17
      // Predicated region
      $region53: #{tpu_custom_call.1} parent=5 // pred_check
        %p375 = pneg %p374
      $region54: #{tpu_custom_call.1} parent=5 // pred_check_branch
        %377 = sbr.rel (%p375) target = $region56
      $region55: #{tpu_custom_call.1} parent=5 // pred_region
        %s378 = ssub.s32 %s17, 2
        // Predicated region
        $region57: #{tpu_custom_call.1} parent=55 // pred_check
          %p379 = pneg %p114
        $region58: #{tpu_custom_call.1} parent=55 // pred_check_branch
          %381 = sbr.rel (%p379) target = $region60
        $region59: #{tpu_custom_call.1} parent=55 // pred_region
          %s382 = sand.u32 %s99, 1
          %s383 = scalar_lea.sflag [#allocation4], %s382
          %s384 = sand.u32 %s99, 1
          %s385 = smul.addr %s384, 24
          %s386 = scalar_lea.vmem [#allocation7], %s385
          %387 = dma.done %s383, 384
        $region60: #{tpu_custom_call.1} parent=55 // pred_fallthru
          _
      $region56: #{tpu_custom_call.1} parent=5 // pred_fallthru
        _
    $region6: #{tpu_custom_call.1} parent=1 // loop_footer
      %s21 = sadd.s32 1, %s17
    $region7: #{tpu_custom_call.1} parent=1 // loop_footer_branch
      %16 = sbr.rel target = $region3
    $region8: #{tpu_custom_call.1} parent=1 // loop_exit
      _
    %388 = vsyncpa [#allocation3], 1
    %s389 = scalar_lea.sflag [#allocation3], 1
    %390 = vsyncpa %s389, 1
    %391 = vsyncpa [#allocation6], 1
    %s392 = scalar_lea.sflag [#allocation6], 1
    %393 = vsyncpa %s392, 1
    %394 = vsyncpa [#allocation4], 1
    %s395 = scalar_lea.sflag [#allocation4], 1
    %396 = vsyncpa %s395, 1

</llo_original>
